<compile_context>
chip_gen: v6e
topology: v6e:2x2x1
jax: 0.10.0
libtpu: 0.0.40
codegen_flags: <defaults>
</compile_context>

<pallas_src>
import functools

import jax
import jax.numpy as jnp
from jax.experimental import pallas as pl
from jax.experimental.pallas import tpu as pltpu


def _round_up(a, b):
    return (a + b - 1) // b * b


def _cdiv(a, b):
    return -(-a // b)


# --------------------------------------------------------------------------
# One-time parameter preparation (hoisted out of the forward pass).
# --------------------------------------------------------------------------
def prepare_mlp_params(w1, b1, w2, b2, gamma=None, beta=None,
                       mxu_dtype=jnp.bfloat16):
    """Pad the hidden dim to a multiple of 128 and cast weights to the MXU
    dtype once, at model-init time. Zero padding keeps the math exact:
    GELU(0 + 0) == 0 and the padded W2 rows are zero."""
    Cin, H = w1.shape
    H2, Cout = w2.shape
    assert H2 == H
    Hp = _round_up(H, 128)

    w1p = jnp.zeros((Cin, Hp), mxu_dtype).at[:, :H].set(w1.astype(mxu_dtype))
    b1p = jnp.zeros((1, Hp), jnp.float32).at[0, :H].set(b1.astype(jnp.float32))
    w2p = jnp.zeros((Hp, Cout), mxu_dtype).at[:H, :].set(w2.astype(mxu_dtype))
    b2p = b2.astype(jnp.float32).reshape(1, Cout)
    if gamma is None:
        gamma = jnp.ones((Cin,), jnp.float32)
    if beta is None:
        beta = jnp.zeros((Cin,), jnp.float32)

    return {
        "w1": w1p, "b1": b1p, "w2": w2p, "b2": b2p,
        "gamma": gamma.astype(jnp.float32).reshape(1, Cin),
        "beta": beta.astype(jnp.float32).reshape(1, Cin),
        "dims": (Cin, H, Hp, Cout),
        "mxu_dtype": mxu_dtype,
    }


# --------------------------------------------------------------------------
# VMEM budget / tile selection.
# --------------------------------------------------------------------------
def _vmem_budget_bytes():
    cap = 64 << 20  # conservative default = v7x per-TensorCore VMEM
    try:
        info = pltpu.get_tpu_info()
        cap = int(getattr(info, "vmem_capacity_bytes", cap))
    except Exception:
        pass
    # Leave headroom for Mosaic internal scratch / semaphores / metadata:
    # 64 MiB (v7x) -> 48 MiB budget, 128 MiB (v5e/v6e) -> 96 MiB budget.
    return max(32 << 20, min(cap * 3 // 4, 100 << 20))


def _pick_tiles(M, Cin, Hp, Cout, x_bytes, out_bytes, budget):
    big = budget >= (80 << 20)
    cand = (1024, 768, 512, 384, 256, 128) if big else (512, 384, 256, 128)
    max_tile = cand[0]

    if M <= max_tile:
        tile_m = M
        if M >= 512 and M % 16 == 0:
            tile_m = M // 2          # >=2 "parallel" M tiles for dual-TC v7x
    else:
        exact = [t for t in cand if M % t == 0]
        if exact:
            tile_m = exact[0]        # no row-padding waste
        else:
            tile_m = min(cand, key=lambda t: (_cdiv(M, t) * t - M, -t))

    def need(tm, th):
        return (2 * tm * Cin * x_bytes            # x tile (double-buffered)
                + 2 * Cin * th * 2                # W1 slab
                + 2 * th * Cout * 2               # W2 slab
                + 2 * (th + Cout + 2 * Cin) * 4   # b1/b2/gamma/beta
                + 2 * tm * Cout * out_bytes       # output tile
                + tm * Cout * 4                   # f32 accumulator scratch
                + tm * Cin * 2                    # normalized-x scratch
                + 2 * tm * th * 4)                # fc1 intermediate (+slack)

    def pick_tile_h(tm):
        # Largest tile_h that exactly divides Hp (multiple of 128) and fits.
        k128 = Hp // 128
        for n in range(1, k128 + 1):
            if k128 % n == 0:
                th = Hp // n
                if need(tm, th) <= budget or th == 128:
                    return th
        return 128

    tile_h = pick_tile_h(tile_m)
    while need(tile_m, tile_h) > budget and tile_m > 128:
        tile_m = max(128, _round_up(tile_m // 2, 8))
        tile_h = pick_tile_h(tile_m)
    return tile_m, tile_h


# --------------------------------------------------------------------------
# Kernel: [LayerNorm ->] fc1 -> GELU -> fc2 [-> +residual]
# Grid = (M tiles ["parallel"], hidden slabs ["arbitrary"]); when the weights
# are VMEM-resident the hidden axis has a single step and W1/W2 are DMA'd
# exactly once (constant block index across the whole grid).
# --------------------------------------------------------------------------
def _ln_mlp_kernel(x_ref, g_ref, bt_ref, w1_ref, b1_ref, w2_ref, b2_ref,
                   o_ref, acc_ref, xn_ref, *,
                   n_h_tiles, eps, mxu_dtype, fuse_layernorm, fuse_residual):
    k = pl.program_id(1)

    @pl.when(k == 0)
    def _prologue():
        x = x_ref[...].astype(jnp.float32)
        if fuse_layernorm:
            mu = jnp.mean(x, axis=-1, keepdims=True)
            var = jnp.mean(jnp.square(x - mu), axis=-1, keepdims=True)
            x = (x - mu) * jax.lax.rsqrt(var + eps)
            x = x * g_ref[...] + bt_ref[...]
        xn_ref[...] = x.astype(mxu_dtype)          # in-kernel bf16 cast
        acc_ref[...] = jnp.zeros_like(acc_ref)

    # fc1 slab: (tile_m, Cin) @ (Cin, tile_h), f32 accumulation on the MXU.
    h = jnp.dot(xn_ref[...], w1_ref[...], preferred_element_type=jnp.float32)
    h = jax.nn.gelu(h + b1_ref[...], approximate=True)   # tanh GELU -> EUP
    # fc2 slab accumulate: (tile_m, tile_h) @ (tile_h, Cout).
    acc_ref[...] += jnp.dot(h.astype(mxu_dtype), w2_ref[...],
                            preferred_element_type=jnp.float32)

    @pl.when(k == n_h_tiles - 1)
    def _epilogue():
        y = acc_ref[...] + b2_ref[...]
        if fuse_residual:
            y = y + x_ref[...].astype(jnp.float32)
        o_ref[...] = y.astype(o_ref.dtype)


def mlla_mlp_block_pallas(x, params, *, fuse_layernorm=True,
                          fuse_residual=True, eps=1e-5, out_dtype=None):
    """Computes `x + Mlp(LayerNorm(x))` (the norm2 / mlp / residual tail of
    MLLABlock). Set fuse_layernorm=False and fuse_residual=False for the bare
    Mlp. `params` comes from prepare_mlp_params()."""
    B, N, Cin = x.shape
    p_cin, H, Hp, Cout = params["dims"]
    assert p_cin == Cin, "x channel dim does not match prepared params"
    if fuse_residual:
        assert Cout == Cin, "residual add requires out_features == in_features"
    mxu_dtype = params["mxu_dtype"]
    out_dtype = out_dtype or x.dtype
    M = B * N
    x2 = x.reshape(M, Cin)          # metadata-only reshape; no pad, no cast

    budget = _vmem_budget_bytes()
    tile_m, tile_h = _pick_tiles(M, Cin, Hp, Cout,
                                 jnp.dtype(x.dtype).itemsize,
                                 jnp.dtype(out_dtype).itemsize, budget)
    n_m = _cdiv(M, tile_m)
    n_h = Hp // tile_h

    kernel = functools.partial(
        _ln_mlp_kernel, n_h_tiles=n_h, eps=eps, mxu_dtype=mxu_dtype,
        fuse_layernorm=fuse_layernorm, fuse_residual=fuse_residual)

    w_bytes = (Cin * Hp + Hp * Cout) * jnp.dtype(mxu_dtype).itemsize
    cost = pl.CostEstimate(
        flops=2 * n_m * tile_m * (Cin * Hp + Hp * Cout),
        transcendentals=n_m * tile_m * Hp,
        bytes_accessed=(M * Cin * jnp.dtype(x.dtype).itemsize
                        + (1 if n_h == 1 else n_m) * w_bytes
                        + (Hp + Cout + 2 * Cin) * 4
                        + M * Cout * jnp.dtype(out_dtype).itemsize),
    )

    out = pl.pallas_call(
        kernel,
        out_shape=jax.ShapeDtypeStruct((M, Cout), out_dtype),
        grid_spec=pltpu.PrefetchScalarGridSpec(
            num_scalar_prefetch=0,
            grid=(n_m, n_h),
            in_specs=[
                pl.BlockSpec((tile_m, Cin), lambda i, k: (i, 0)),   # x
                pl.BlockSpec((1, Cin), lambda i, k: (0, 0)),        # gamma
                pl.BlockSpec((1, Cin), lambda i, k: (0, 0)),        # beta
                pl.BlockSpec((Cin, tile_h), lambda i, k: (0, k)),   # W1
                pl.BlockSpec((1, tile_h), lambda i, k: (0, k)),     # b1
                pl.BlockSpec((tile_h, Cout), lambda i, k: (k, 0)),  # W2
                pl.BlockSpec((1, Cout), lambda i, k: (0, 0)),       # b2
            ],
            out_specs=pl.BlockSpec((tile_m, Cout), lambda i, k: (i, 0)),
            scratch_shapes=[
                pltpu.VMEM((tile_m, Cout), jnp.float32),   # fc2 accumulator
                pltpu.VMEM((tile_m, Cin), mxu_dtype),      # normalized x
            ],
        ),
        compiler_params=pltpu.CompilerParams(
            dimension_semantics=("parallel", "arbitrary"),
            vmem_limit_bytes=budget,
        ),
        cost_estimate=cost,
    )(x2, params["gamma"], params["beta"],
      params["w1"], params["b1"], params["w2"], params["b2"])

    return out.reshape(B, N, Cout)


# --------------------------------------------------------------------------
# Pure-JAX reference (same tanh-GELU approximation, f32 math).
# --------------------------------------------------------------------------
def mlla_mlp_block_reference(x, w1, b1, w2, b2, gamma, beta, *, eps=1e-5,
                             fuse_layernorm=True, fuse_residual=True):
    xf = x.astype(jnp.float32)
    if fuse_layernorm:
        mu = jnp.mean(xf, axis=-1, keepdims=True)
        var = jnp.mean(jnp.square(xf - mu), axis=-1, keepdims=True)
        xn = (xf - mu) * jax.lax.rsqrt(var + eps) * gamma + beta
    else:
        xn = xf
    h = xn @ w1.astype(jnp.float32) + b1
    h = jax.nn.gelu(h, approximate=True)
    y = h @ w2.astype(jnp.float32) + b2
    if fuse_residual:
        y = y + xf
    return y.astype(x.dtype)


if __name__ == "__main__":
    # Small shapes consistent with the Mlp inside MLLABlock (mlp_ratio=4):
    # batch=2, 8x8 resolution -> seq=64 tokens, dim=32, hidden=128.
    B, Hres, Wres, C = 2, 8, 8, 32
    N = Hres * Wres
    Hid = 4 * C

    key = jax.random.PRNGKey(0)
    kx, kw1, kb1, kw2, kb2, kg, kbt = jax.random.split(key, 7)

    x = jax.random.normal(kx, (B, N, C), dtype=jnp.float32)
    w1 = jax.random.normal(kw1, (C, Hid), dtype=jnp.float32) * (1.0 / C ** 0.5)
    b1 = jax.random.normal(kb1, (Hid,), dtype=jnp.float32) * 0.01
    w2 = jax.random.normal(kw2, (Hid, C), dtype=jnp.float32) * (1.0 / Hid ** 0.5)
    b2 = jax.random.normal(kb2, (C,), dtype=jnp.float32) * 0.01
    gamma = 1.0 + 0.1 * jax.random.normal(kg, (C,), dtype=jnp.float32)
    beta = 0.1 * jax.random.normal(kbt, (C,), dtype=jnp.float32)

    # One-time parameter preparation (model init), not part of the forward.
    params = prepare_mlp_params(w1, b1, w2, b2, gamma, beta)

    out = mlla_mlp_block_pallas(x, params)
    out = jax.block_until_ready(out)

    ref = mlla_mlp_block_reference(x, w1, b1, w2, b2, gamma, beta)
    assert out.shape == (B, N, C)
    # bf16 MXU inputs -> loosened tolerance vs the f32 reference.
    max_err = float(jnp.max(jnp.abs(out - ref)))
    assert jnp.allclose(out, ref, atol=5e-2, rtol=5e-2), max_err

    print("KERNEL_OK")
</pallas_src>

<mosaic_0001>
module attributes {stable_mosaic.version = 11 : i64} {
  func.func @_ln_mlp_kernel(%arg0: i32, %arg1: i32, %arg2: memref<128x32xf32, #tpu.memory_space<vmem>>, %arg3: memref<1x32xf32, #tpu.memory_space<vmem>>, %arg4: memref<1x32xf32, #tpu.memory_space<vmem>>, %arg5: memref<32x128xbf16, #tpu.memory_space<vmem>>, %arg6: memref<1x128xf32, #tpu.memory_space<vmem>>, %arg7: memref<128x32xbf16, #tpu.memory_space<vmem>>, %arg8: memref<1x32xf32, #tpu.memory_space<vmem>>, %arg9: memref<128x32xf32, #tpu.memory_space<vmem>>, %arg10: memref<128x32xf32, #tpu.memory_space<vmem>>, %arg11: memref<128x32xbf16, #tpu.memory_space<vmem>>) attributes {dimension_semantics = [#tpu.dimension_semantics<parallel>, #tpu.dimension_semantics<arbitrary>], iteration_bounds = array<i64: 1, 1>, scalar_prefetch = 0 : i64, scratch_operands = 2 : i64, tpu.core_type = #tpu.core_type<tc>, window_params = [{transform_indices = @transform_0, window_bounds = array<i64: 128, 32>}, {pipeline_mode = #tpu.pipeline_mode<synchronous>, transform_indices = @transform_1, window_bounds = array<i64: 1, 32>}, {pipeline_mode = #tpu.pipeline_mode<synchronous>, transform_indices = @transform_2, window_bounds = array<i64: 1, 32>}, {transform_indices = @transform_3, window_bounds = array<i64: 32, 128>}, {transform_indices = @transform_4, window_bounds = array<i64: 1, 128>}, {transform_indices = @transform_5, window_bounds = array<i64: 128, 32>}, {pipeline_mode = #tpu.pipeline_mode<synchronous>, transform_indices = @transform_6, window_bounds = array<i64: 1, 32>}, {transform_indices = @transform_7, window_bounds = array<i64: 128, 32>}]} {
    %c0_i32 = arith.constant 0 : i32
    %0 = arith.cmpi eq, %arg1, %c0_i32 : i32
    %1 = arith.extui %0 : i1 to i32
    %c0_i32_0 = arith.constant 0 : i32
    %2 = arith.cmpi ne, %1, %c0_i32_0 : i32
    scf.if %2 {
      %c0_19 = arith.constant 0 : index
      %c0_20 = arith.constant 0 : index
      %31 = vector.load %arg2[%c0_19, %c0_20] : memref<128x32xf32, #tpu.memory_space<vmem>>, vector<128x32xf32>
      %cst_21 = arith.constant dense<0.000000e+00> : vector<128xf32>
      %32 = vector.multi_reduction <add>, %31, %cst_21 [1] : vector<128x32xf32> to vector<128xf32>
      %33 = vector.shape_cast %32 : vector<128xf32> to vector<128x1xf32>
      %cst_22 = arith.constant 3.200000e+01 : f32
      %34 = vector.broadcast %cst_22 : f32 to vector<128x1xf32>
      %35 = arith.divf %33, %34 : vector<128x1xf32>
      %36 = vector.broadcast %35 : vector<128x1xf32> to vector<128x32xf32>
      %37 = arith.subf %31, %36 : vector<128x32xf32>
      %38 = arith.mulf %37, %37 : vector<128x32xf32>
      %cst_23 = arith.constant dense<0.000000e+00> : vector<128xf32>
      %39 = vector.multi_reduction <add>, %38, %cst_23 [1] : vector<128x32xf32> to vector<128xf32>
      %40 = vector.shape_cast %39 : vector<128xf32> to vector<128x1xf32>
      %cst_24 = arith.constant 3.200000e+01 : f32
      %41 = vector.broadcast %cst_24 : f32 to vector<128x1xf32>
      %42 = arith.divf %40, %41 : vector<128x1xf32>
      %43 = vector.broadcast %35 : vector<128x1xf32> to vector<128x32xf32>
      %44 = arith.subf %31, %43 : vector<128x32xf32>
      %cst_25 = arith.constant 9.99999974E-6 : f32
      %45 = vector.broadcast %cst_25 : f32 to vector<128x1xf32>
      %46 = arith.addf %42, %45 : vector<128x1xf32>
      %47 = math.rsqrt %46 : vector<128x1xf32>
      %48 = vector.broadcast %47 : vector<128x1xf32> to vector<128x32xf32>
      %49 = arith.mulf %44, %48 : vector<128x32xf32>
      %c0_26 = arith.constant 0 : index
      %c0_27 = arith.constant 0 : index
      %50 = vector.load %arg3[%c0_26, %c0_27] : memref<1x32xf32, #tpu.memory_space<vmem>>, vector<1x32xf32>
      %51 = vector.broadcast %50 : vector<1x32xf32> to vector<128x32xf32>
      %52 = arith.mulf %49, %51 : vector<128x32xf32>
      %c0_28 = arith.constant 0 : index
      %c0_29 = arith.constant 0 : index
      %53 = vector.load %arg4[%c0_28, %c0_29] : memref<1x32xf32, #tpu.memory_space<vmem>>, vector<1x32xf32>
      %54 = vector.broadcast %53 : vector<1x32xf32> to vector<128x32xf32>
      %55 = arith.addf %52, %54 : vector<128x32xf32>
      %56 = arith.truncf %55 : vector<128x32xf32> to vector<128x32xbf16>
      %c0_30 = arith.constant 0 : index
      %c0_31 = arith.constant 0 : index
      %57 = vector.load %arg11[%c0_30, %c0_31] : memref<128x32xbf16, #tpu.memory_space<vmem>>, vector<128x32xbf16>
      tpu.vector_store %arg11[%c0_30, %c0_31], %56 {strides = array<i32>} : memref<128x32xbf16, #tpu.memory_space<vmem>>, vector<128x32xbf16>,
      %cst_32 = arith.constant 0.000000e+00 : f32
      %58 = vector.broadcast %cst_32 : f32 to vector<128x32xf32>
      %c0_33 = arith.constant 0 : index
      %c0_34 = arith.constant 0 : index
      %59 = vector.load %arg10[%c0_33, %c0_34] : memref<128x32xf32, #tpu.memory_space<vmem>>, vector<128x32xf32>
      tpu.vector_store %arg10[%c0_33, %c0_34], %58 {strides = array<i32>} : memref<128x32xf32, #tpu.memory_space<vmem>>, vector<128x32xf32>,
    } else {
    }
    %c0 = arith.constant 0 : index
    %c0_1 = arith.constant 0 : index
    %3 = vector.load %arg11[%c0, %c0_1] : memref<128x32xbf16, #tpu.memory_space<vmem>>, vector<128x32xbf16>
    %c0_2 = arith.constant 0 : index
    %c0_3 = arith.constant 0 : index
    %4 = vector.load %arg5[%c0_2, %c0_3] : memref<32x128xbf16, #tpu.memory_space<vmem>>, vector<32x128xbf16>
    %cst = arith.constant dense<0.000000e+00> : vector<128x128xf32>
    %5 = tpu.matmul %3, %4, %cst {dimension_numbers = #tpu.dot_dimension_numbers<[1], [0], [0], [1], [0, 0, 1, 1], [], []>} : vector<128x32xbf16>, vector<32x128xbf16>, vector<128x128xf32> -> vector<128x128xf32>
    %c0_4 = arith.constant 0 : index
    %c0_5 = arith.constant 0 : index
    %6 = vector.load %arg6[%c0_4, %c0_5] : memref<1x128xf32, #tpu.memory_space<vmem>>, vector<1x128xf32>
    %7 = vector.broadcast %6 : vector<1x128xf32> to vector<128x128xf32>
    %8 = arith.addf %5, %7 : vector<128x128xf32>
    %9 = arith.mulf %8, %8 : vector<128x128xf32>
    %10 = arith.mulf %8, %9 : vector<128x128xf32>
    %cst_6 = arith.constant 4.471500e-02 : f32
    %11 = vector.broadcast %cst_6 : f32 to vector<128x128xf32>
    %12 = arith.mulf %11, %10 : vector<128x128xf32>
    %13 = arith.addf %8, %12 : vector<128x128xf32>
    %cst_7 = arith.constant 0.797884583 : f32
    %14 = vector.broadcast %cst_7 : f32 to vector<128x128xf32>
    %15 = arith.mulf %14, %13 : vector<128x128xf32>
    %16 = math.tanh %15 : vector<128x128xf32>
    %cst_8 = arith.constant 1.000000e+00 : f32
    %17 = vector.broadcast %cst_8 : f32 to vector<128x128xf32>
    %18 = arith.addf %17, %16 : vector<128x128xf32>
    %cst_9 = arith.constant 5.000000e-01 : f32
    %19 = vector.broadcast %cst_9 : f32 to vector<128x128xf32>
    %20 = arith.mulf %19, %18 : vector<128x128xf32>
    %21 = arith.mulf %8, %20 : vector<128x128xf32>
    %c0_10 = arith.constant 0 : index
    %c0_11 = arith.constant 0 : index
    %22 = vector.load %arg10[%c0_10, %c0_11] : memref<128x32xf32, #tpu.memory_space<vmem>>, vector<128x32xf32>
    %23 = arith.truncf %21 : vector<128x128xf32> to vector<128x128xbf16>
    %c0_12 = arith.constant 0 : index
    %c0_13 = arith.constant 0 : index
    %24 = vector.load %arg7[%c0_12, %c0_13] : memref<128x32xbf16, #tpu.memory_space<vmem>>, vector<128x32xbf16>
    %cst_14 = arith.constant dense<0.000000e+00> : vector<128x32xf32>
    %25 = tpu.matmul %23, %24, %cst_14 {dimension_numbers = #tpu.dot_dimension_numbers<[1], [0], [0], [1], [0, 0, 1, 1], [], []>} : vector<128x128xbf16>, vector<128x32xbf16>, vector<128x32xf32> -> vector<128x32xf32>
    %26 = arith.addf %22, %25 : vector<128x32xf32>
    %c0_15 = arith.constant 0 : index
    %c0_16 = arith.constant 0 : index
    %27 = vector.load %arg10[%c0_15, %c0_16] : memref<128x32xf32, #tpu.memory_space<vmem>>, vector<128x32xf32>
    tpu.vector_store %arg10[%c0_15, %c0_16], %26 {strides = array<i32>} : memref<128x32xf32, #tpu.memory_space<vmem>>, vector<128x32xf32>,
    %c0_i32_17 = arith.constant 0 : i32
    %28 = arith.cmpi eq, %arg1, %c0_i32_17 : i32
    %29 = arith.extui %28 : i1 to i32
    %c0_i32_18 = arith.constant 0 : i32
    %30 = arith.cmpi ne, %29, %c0_i32_18 : i32
    scf.if %30 {
      %c0_19 = arith.constant 0 : index
      %c0_20 = arith.constant 0 : index
      %31 = vector.load %arg10[%c0_19, %c0_20] : memref<128x32xf32, #tpu.memory_space<vmem>>, vector<128x32xf32>
      %c0_21 = arith.constant 0 : index
      %c0_22 = arith.constant 0 : index
      %32 = vector.load %arg8[%c0_21, %c0_22] : memref<1x32xf32, #tpu.memory_space<vmem>>, vector<1x32xf32>
      %33 = vector.broadcast %32 : vector<1x32xf32> to vector<128x32xf32>
      %34 = arith.addf %31, %33 : vector<128x32xf32>
      %c0_23 = arith.constant 0 : index
      %c0_24 = arith.constant 0 : index
      %35 = vector.load %arg2[%c0_23, %c0_24] : memref<128x32xf32, #tpu.memory_space<vmem>>, vector<128x32xf32>
      %36 = arith.addf %34, %35 : vector<128x32xf32>
      %c0_25 = arith.constant 0 : index
      %c0_26 = arith.constant 0 : index
      %37 = vector.load %arg9[%c0_25, %c0_26] : memref<128x32xf32, #tpu.memory_space<vmem>>, vector<128x32xf32>
      tpu.vector_store %arg9[%c0_25, %c0_26], %36 {strides = array<i32>} : memref<128x32xf32, #tpu.memory_space<vmem>>, vector<128x32xf32>,
    } else {
    }
    return
  }
  func.func @transform_0(%arg0: i32, %arg1: i32) -> (i32, i32) {
    %c0_i32 = arith.constant 0 : i32
    %c0_i32_0 = arith.constant 0 : i32
    return %arg0, %c0_i32 : i32, i32
  }
  func.func @transform_1(%arg0: i32, %arg1: i32) -> (i32, i32) {
    %c0_i32 = arith.constant 0 : i32
    %c0_i32_0 = arith.constant 0 : i32
    %c0_i32_1 = arith.constant 0 : i32
    return %c0_i32, %c0_i32_0 : i32, i32
  }
  func.func @transform_2(%arg0: i32, %arg1: i32) -> (i32, i32) {
    %c0_i32 = arith.constant 0 : i32
    %c0_i32_0 = arith.constant 0 : i32
    %c0_i32_1 = arith.constant 0 : i32
    return %c0_i32, %c0_i32_0 : i32, i32
  }
  func.func @transform_3(%arg0: i32, %arg1: i32) -> (i32, i32) {
    %c0_i32 = arith.constant 0 : i32
    %c0_i32_0 = arith.constant 0 : i32
    return %c0_i32, %arg1 : i32, i32
  }
  func.func @transform_4(%arg0: i32, %arg1: i32) -> (i32, i32) {
    %c0_i32 = arith.constant 0 : i32
    %c0_i32_0 = arith.constant 0 : i32
    return %c0_i32, %arg1 : i32, i32
  }
  func.func @transform_5(%arg0: i32, %arg1: i32) -> (i32, i32) {
    %c0_i32 = arith.constant 0 : i32
    %c0_i32_0 = arith.constant 0 : i32
    return %arg1, %c0_i32 : i32, i32
  }
  func.func @transform_6(%arg0: i32, %arg1: i32) -> (i32, i32) {
    %c0_i32 = arith.constant 0 : i32
    %c0_i32_0 = arith.constant 0 : i32
    %c0_i32_1 = arith.constant 0 : i32
    return %c0_i32, %c0_i32_0 : i32, i32
  }
  func.func @transform_7(%arg0: i32, %arg1: i32) -> (i32, i32) {
    %c0_i32 = arith.constant 0 : i32
    %c0_i32_0 = arith.constant 0 : i32
    return %arg0, %c0_i32 : i32, i32
  }
}

</mosaic_0001>

<llo_original>
// kernel: tpu_custom_call.1
$region0: #{tpu_custom_call.1}
  #allocation0 [shape = 'u32[]', space=smem, size = 0x4, offset = 0x4, fixed_abs, tag = 'smem constant byte address 0x4 - core index']
  #allocation1 [shape = 'u32[144,128]{1,0:T(1,128)}', space=vmem, size = 0x12000, scoped, tag = 'internal scratch']
  #allocation2 [shape = 'f32[128,32]{1,0:T(8,128)}', space=vmem, size = 0x10000, scoped, tag = 'scratch operand']
  #allocation3 [shape = 'bf16[128,32]{1,0:T(8,128)(2,1)}', space=vmem, size = 0x8000, scoped, tag = 'scratch operand']
  %s0 = inlined_call_operand.vmem [shape: f32[128,32], index: 0, kind: input, shape index: {}]
  %s1 = inlined_call_operand.vmem [shape: f32[1,32], index: 1, kind: input, shape index: {}]
  %s2 = inlined_call_operand.vmem [shape: f32[1,32], index: 2, kind: input, shape index: {}]
  %s3 = inlined_call_operand.vmem [shape: bf16[32,128], index: 3, kind: input, shape index: {}]
  %s4 = inlined_call_operand.vmem [shape: f32[1,128], index: 4, kind: input, shape index: {}]
  %s5 = inlined_call_operand.vmem [shape: bf16[128,32], index: 5, kind: input, shape index: {}]
  %s6 = inlined_call_operand.vmem [shape: f32[1,32], index: 6, kind: input, shape index: {}]
  %s7 = inlined_call_operand.vmem [shape: f32[128,32], index: 7, kind: output, shape index: {}]
  %s8 = sld [smem:[#allocation0]]
  $region46: #{tpu_custom_call.1} parent=0
    _
  %s10 = ssub.s32 1, %s8
  %s11 = scalar_select 0, %s10, %s8
  // Predicated region
  $region2: #{tpu_custom_call.1} parent=0 // pred_check
    _
  $region3: #{tpu_custom_call.1} parent=0 // pred_check_branch
    %13 = sbr.rel (0) target = $region5
  $region4: #{tpu_custom_call.1} parent=0 // pred_region
    _
  $region5: #{tpu_custom_call.1} parent=0 // pred_fallthru
    _
  // Predicated region
  $region6: #{tpu_custom_call.1} parent=0 // pred_check
    _
  $region7: #{tpu_custom_call.1} parent=0 // pred_check_branch
    %15 = sbr.rel (0) target = $region9
  $region8: #{tpu_custom_call.1} parent=0 // pred_region
    _
  $region9: #{tpu_custom_call.1} parent=0 // pred_fallthru
    _
  // Predicated region
  $region10: #{tpu_custom_call.1} parent=0 // pred_check
    _
  $region11: #{tpu_custom_call.1} parent=0 // pred_check_branch
    %17 = sbr.rel (0) target = $region13
  $region12: #{tpu_custom_call.1} parent=0 // pred_region
    _
  $region13: #{tpu_custom_call.1} parent=0 // pred_fallthru
    _
  // Predicated region
  $region14: #{tpu_custom_call.1} parent=0 // pred_check
    _
  $region15: #{tpu_custom_call.1} parent=0 // pred_check_branch
    %19 = sbr.rel (0) target = $region17
  $region16: #{tpu_custom_call.1} parent=0 // pred_region
    _
  $region17: #{tpu_custom_call.1} parent=0 // pred_fallthru
    _
  // Predicated region
  $region18: #{tpu_custom_call.1} parent=0 // pred_check
    _
  $region19: #{tpu_custom_call.1} parent=0 // pred_check_branch
    %21 = sbr.rel (0) target = $region21
  $region20: #{tpu_custom_call.1} parent=0 // pred_region
    _
  $region21: #{tpu_custom_call.1} parent=0 // pred_fallthru
    _
  // Predicated region
  $region22: #{tpu_custom_call.1} parent=0 // pred_check
    _
  $region23: #{tpu_custom_call.1} parent=0 // pred_check_branch
    %23 = sbr.rel (0) target = $region25
  $region24: #{tpu_custom_call.1} parent=0 // pred_region
    _
  $region25: #{tpu_custom_call.1} parent=0 // pred_fallthru
    _
  // Predicated region
  $region26: #{tpu_custom_call.1} parent=0 // pred_check
    _
  $region27: #{tpu_custom_call.1} parent=0 // pred_check_branch
    %25 = sbr.rel (0) target = $region29
  $region28: #{tpu_custom_call.1} parent=0 // pred_region
    _
  $region29: #{tpu_custom_call.1} parent=0 // pred_fallthru
    _
  %p27 = scmp.eq.s32.totalorder 0, 0
  // Predicated region
  $region30: #{tpu_custom_call.1} parent=0 // pred_check
    %p28 = pneg %p27
  $region31: #{tpu_custom_call.1} parent=0 // pred_check_branch
    %30 = sbr.rel (%p28) target = $region33
  $region32: #{tpu_custom_call.1} parent=0 // pred_region
    %v31 = vld [vmem:[%s0] sm:$0xff]
    %v32 = vld [vmem:[%s0 + $0x8] sm:$0xff]
    %v33 = vld [vmem:[%s0 + $0x10] sm:$0xff]
    %v34 = vld [vmem:[%s0 + $0x18] sm:$0xff]
    %v35 = vld [vmem:[%s0 + $0x20] sm:$0xff]
    %v36 = vld [vmem:[%s0 + $0x28] sm:$0xff]
    %v37 = vld [vmem:[%s0 + $0x30] sm:$0xff]
    %v38 = vld [vmem:[%s0 + $0x38] sm:$0xff]
    %v39 = vld [vmem:[%s0 + $0x40] sm:$0xff]
    %v40 = vld [vmem:[%s0 + $0x48] sm:$0xff]
    %v41 = vld [vmem:[%s0 + $0x50] sm:$0xff]
    %v42 = vld [vmem:[%s0 + $0x58] sm:$0xff]
    %v43 = vld [vmem:[%s0 + $0x60] sm:$0xff]
    %v44 = vld [vmem:[%s0 + $0x68] sm:$0xff]
    %v45 = vld [vmem:[%s0 + $0x70] sm:$0xff]
    %v46 = vld [vmem:[%s0 + $0x78] sm:$0xff]
    %vm47 = vcmask 261120
    %v48 = vsel %vm47, %v31, 0.0
    %49 = vadd.xlane.f32.xlu0 %v48
    %v50 = vpop.xlane.xlu0 %49
    %v51 = vsel %vm47, %v32, 0.0
    %52 = vadd.xlane.f32.xlu0 %v51
    %v53 = vpop.xlane.xlu0 %52
    %v54 = vsel %vm47, %v33, 0.0
    %55 = vadd.xlane.f32.xlu0 %v54
    %v56 = vpop.xlane.xlu0 %55
    %v57 = vsel %vm47, %v34, 0.0
    %58 = vadd.xlane.f32.xlu0 %v57
    %v59 = vpop.xlane.xlu0 %58
    %v60 = vsel %vm47, %v35, 0.0
    %61 = vadd.xlane.f32.xlu0 %v60
    %v62 = vpop.xlane.xlu0 %61
    %v63 = vsel %vm47, %v36, 0.0
    %64 = vadd.xlane.f32.xlu0 %v63
    %v65 = vpop.xlane.xlu0 %64
    %v66 = vsel %vm47, %v37, 0.0
    %67 = vadd.xlane.f32.xlu0 %v66
    %v68 = vpop.xlane.xlu0 %67
    %v69 = vsel %vm47, %v38, 0.0
    %70 = vadd.xlane.f32.xlu0 %v69
    %v71 = vpop.xlane.xlu0 %70
    %v72 = vsel %vm47, %v39, 0.0
    %73 = vadd.xlane.f32.xlu0 %v72
    %v74 = vpop.xlane.xlu0 %73
    %v75 = vsel %vm47, %v40, 0.0
    %76 = vadd.xlane.f32.xlu0 %v75
    %v77 = vpop.xlane.xlu0 %76
    %v78 = vsel %vm47, %v41, 0.0
    %79 = vadd.xlane.f32.xlu0 %v78
    %v80 = vpop.xlane.xlu0 %79
    %v81 = vsel %vm47, %v42, 0.0
    %82 = vadd.xlane.f32.xlu0 %v81
    %v83 = vpop.xlane.xlu0 %82
    %v84 = vsel %vm47, %v43, 0.0
    %85 = vadd.xlane.f32.xlu0 %v84
    %v86 = vpop.xlane.xlu0 %85
    %v87 = vsel %vm47, %v44, 0.0
    %88 = vadd.xlane.f32.xlu0 %v87
    %v89 = vpop.xlane.xlu0 %88
    %v90 = vsel %vm47, %v45, 0.0
    %91 = vadd.xlane.f32.xlu0 %v90
    %v92 = vpop.xlane.xlu0 %91
    %v93 = vsel %vm47, %v46, 0.0
    %94 = vadd.xlane.f32.xlu0 %v93
    %v95 = vpop.xlane.xlu0 %94
    %v96 = vrcp.pop 32.0
    %v97 = vmul.f32 %v50, %v96
    %v98 = vmul.f32 %v53, %v96
    %v99 = vmul.f32 %v56, %v96
    %v100 = vmul.f32 %v59, %v96
    %v101 = vmul.f32 %v62, %v96
    %v102 = vmul.f32 %v65, %v96
    %v103 = vmul.f32 %v68, %v96
    %v104 = vmul.f32 %v71, %v96
    %v105 = vmul.f32 %v74, %v96
    %v106 = vmul.f32 %v77, %v96
    %v107 = vmul.f32 %v80, %v96
    %v108 = vmul.f32 %v83, %v96
    %v109 = vmul.f32 %v86, %v96
    %v110 = vmul.f32 %v89, %v96
    %v111 = vmul.f32 %v92, %v96
    %v112 = vmul.f32 %v95, %v96
    %v113 = vsub.f32 %v31, %v97
    %v114 = vsub.f32 %v32, %v98
    %v115 = vsub.f32 %v33, %v99
    %v116 = vsub.f32 %v34, %v100
    %v117 = vsub.f32 %v35, %v101
    %v118 = vsub.f32 %v36, %v102
    %v119 = vsub.f32 %v37, %v103
    %v120 = vsub.f32 %v38, %v104
    %v121 = vsub.f32 %v39, %v105
    %v122 = vsub.f32 %v40, %v106
    %v123 = vsub.f32 %v41, %v107
    %v124 = vsub.f32 %v42, %v108
    %v125 = vsub.f32 %v43, %v109
    %v126 = vsub.f32 %v44, %v110
    %v127 = vsub.f32 %v45, %v111
    %v128 = vsub.f32 %v46, %v112
    %v129 = vmul.f32 %v113, %v113
    %v130 = vmul.f32 %v114, %v114
    %v131 = vmul.f32 %v115, %v115
    %v132 = vmul.f32 %v116, %v116
    %v133 = vmul.f32 %v117, %v117
    %v134 = vmul.f32 %v118, %v118
    %v135 = vmul.f32 %v119, %v119
    %v136 = vmul.f32 %v120, %v120
    %v137 = vmul.f32 %v121, %v121
    %v138 = vmul.f32 %v122, %v122
    %v139 = vmul.f32 %v123, %v123
    %v140 = vmul.f32 %v124, %v124
    %v141 = vmul.f32 %v125, %v125
    %v142 = vmul.f32 %v126, %v126
    %v143 = vmul.f32 %v127, %v127
    %v144 = vmul.f32 %v128, %v128
    %v145 = vsel %vm47, %v129, 0.0
    %146 = vadd.xlane.f32.xlu0 %v145
    %v147 = vpop.xlane.xlu0 %146
    %v148 = vsel %vm47, %v130, 0.0
    %149 = vadd.xlane.f32.xlu0 %v148
    %v150 = vpop.xlane.xlu0 %149
    %v151 = vsel %vm47, %v131, 0.0
    %152 = vadd.xlane.f32.xlu0 %v151
    %v153 = vpop.xlane.xlu0 %152
    %v154 = vsel %vm47, %v132, 0.0
    %155 = vadd.xlane.f32.xlu0 %v154
    %v156 = vpop.xlane.xlu0 %155
    %v157 = vsel %vm47, %v133, 0.0
    %158 = vadd.xlane.f32.xlu0 %v157
    %v159 = vpop.xlane.xlu0 %158
    %v160 = vsel %vm47, %v134, 0.0
    %161 = vadd.xlane.f32.xlu0 %v160
    %v162 = vpop.xlane.xlu0 %161
    %v163 = vsel %vm47, %v135, 0.0
    %164 = vadd.xlane.f32.xlu0 %v163
    %v165 = vpop.xlane.xlu0 %164
    %v166 = vsel %vm47, %v136, 0.0
    %167 = vadd.xlane.f32.xlu0 %v166
    %v168 = vpop.xlane.xlu0 %167
    %v169 = vsel %vm47, %v137, 0.0
    %170 = vadd.xlane.f32.xlu0 %v169
    %v171 = vpop.xlane.xlu0 %170
    %v172 = vsel %vm47, %v138, 0.0
    %173 = vadd.xlane.f32.xlu0 %v172
    %v174 = vpop.xlane.xlu0 %173
    %v175 = vsel %vm47, %v139, 0.0
    %176 = vadd.xlane.f32.xlu0 %v175
    %v177 = vpop.xlane.xlu0 %176
    %v178 = vsel %vm47, %v140, 0.0
    %179 = vadd.xlane.f32.xlu0 %v178
    %v180 = vpop.xlane.xlu0 %179
    %v181 = vsel %vm47, %v141, 0.0
    %182 = vadd.xlane.f32.xlu0 %v181
    %v183 = vpop.xlane.xlu0 %182
    %v184 = vsel %vm47, %v142, 0.0
    %185 = vadd.xlane.f32.xlu0 %v184
    %v186 = vpop.xlane.xlu0 %185
    %v187 = vsel %vm47, %v143, 0.0
    %188 = vadd.xlane.f32.xlu0 %v187
    %v189 = vpop.xlane.xlu0 %188
    %v190 = vsel %vm47, %v144, 0.0
    %191 = vadd.xlane.f32.xlu0 %v190
    %v192 = vpop.xlane.xlu0 %191
    %v193 = vmul.f32 %v147, %v96
    %v194 = vmul.f32 %v150, %v96
    %v195 = vmul.f32 %v153, %v96
    %v196 = vmul.f32 %v156, %v96
    %v197 = vmul.f32 %v159, %v96
    %v198 = vmul.f32 %v162, %v96
    %v199 = vmul.f32 %v165, %v96
    %v200 = vmul.f32 %v168, %v96
    %v201 = vmul.f32 %v171, %v96
    %v202 = vmul.f32 %v174, %v96
    %v203 = vmul.f32 %v177, %v96
    %v204 = vmul.f32 %v180, %v96
    %v205 = vmul.f32 %v183, %v96
    %v206 = vmul.f32 %v186, %v96
    %v207 = vmul.f32 %v189, %v96
    %v208 = vmul.f32 %v192, %v96
    %v209 = vadd.f32 %v193, 1e-05
    %v210 = vadd.f32 %v194, 1e-05
    %v211 = vadd.f32 %v195, 1e-05
    %v212 = vadd.f32 %v196, 1e-05
    %v213 = vadd.f32 %v197, 1e-05
    %v214 = vadd.f32 %v198, 1e-05
    %v215 = vadd.f32 %v199, 1e-05
    %v216 = vadd.f32 %v200, 1e-05
    %v217 = vadd.f32 %v201, 1e-05
    %v218 = vadd.f32 %v202, 1e-05
    %v219 = vadd.f32 %v203, 1e-05
    %v220 = vadd.f32 %v204, 1e-05
    %v221 = vadd.f32 %v205, 1e-05
    %v222 = vadd.f32 %v206, 1e-05
    %v223 = vadd.f32 %v207, 1e-05
    %v224 = vadd.f32 %v208, 1e-05
    %v225 = vrsqrt.pop %v209
    %v226 = vrsqrt.pop %v210
    %v227 = vrsqrt.pop %v211
    %v228 = vrsqrt.pop %v212
    %v229 = vrsqrt.pop %v213
    %v230 = vrsqrt.pop %v214
    %v231 = vrsqrt.pop %v215
    %v232 = vrsqrt.pop %v216
    %v233 = vrsqrt.pop %v217
    %v234 = vrsqrt.pop %v218
    %v235 = vrsqrt.pop %v219
    %v236 = vrsqrt.pop %v220
    %v237 = vrsqrt.pop %v221
    %v238 = vrsqrt.pop %v222
    %v239 = vrsqrt.pop %v223
    %v240 = vrsqrt.pop %v224
    %v241 = vmul.f32 %v113, %v225
    %v242 = vmul.f32 %v114, %v226
    %v243 = vmul.f32 %v115, %v227
    %v244 = vmul.f32 %v116, %v228
    %v245 = vmul.f32 %v117, %v229
    %v246 = vmul.f32 %v118, %v230
    %v247 = vmul.f32 %v119, %v231
    %v248 = vmul.f32 %v120, %v232
    %v249 = vmul.f32 %v121, %v233
    %v250 = vmul.f32 %v122, %v234
    %v251 = vmul.f32 %v123, %v235
    %v252 = vmul.f32 %v124, %v236
    %v253 = vmul.f32 %v125, %v237
    %v254 = vmul.f32 %v126, %v238
    %v255 = vmul.f32 %v127, %v239
    %v256 = vmul.f32 %v128, %v240
    %v257 = vld [vmem:[%s1] sm:$0x1]
    %v259 = vlaneseq
    %v260 = vshrl.u32 %v259, 7
    %v261 = vsub.s32 0, %v260
    %v262 = vrot.slane %v257, %v261
    %v264 = vmul.f32 %v241, %v262
    %v265 = vmul.f32 %v242, %v262
    %v266 = vmul.f32 %v243, %v262
    %v267 = vmul.f32 %v244, %v262
    %v268 = vmul.f32 %v245, %v262
    %v269 = vmul.f32 %v246, %v262
    %v270 = vmul.f32 %v247, %v262
    %v271 = vmul.f32 %v248, %v262
    %v272 = vmul.f32 %v249, %v262
    %v273 = vmul.f32 %v250, %v262
    %v274 = vmul.f32 %v251, %v262
    %v275 = vmul.f32 %v252, %v262
    %v276 = vmul.f32 %v253, %v262
    %v277 = vmul.f32 %v254, %v262
    %v278 = vmul.f32 %v255, %v262
    %v279 = vmul.f32 %v256, %v262
    %v280 = vld [vmem:[%s2] sm:$0x1]
    %v282 = vlaneseq
    %v283 = vshrl.u32 %v282, 7
    %v284 = vsub.s32 0, %v283
    %v285 = vrot.slane %v280, %v284
    %v287 = vadd.f32 %v264, %v285
    %v288 = vadd.f32 %v265, %v285
    %v289 = vadd.f32 %v266, %v285
    %v290 = vadd.f32 %v267, %v285
    %v291 = vadd.f32 %v268, %v285
    %v292 = vadd.f32 %v269, %v285
    %v293 = vadd.f32 %v270, %v285
    %v294 = vadd.f32 %v271, %v285
    %v295 = vadd.f32 %v272, %v285
    %v296 = vadd.f32 %v273, %v285
    %v297 = vadd.f32 %v274, %v285
    %v298 = vadd.f32 %v275, %v285
    %v299 = vadd.f32 %v276, %v285
    %v300 = vadd.f32 %v277, %v285
    %v301 = vadd.f32 %v278, %v285
    %v302 = vadd.f32 %v279, %v285
    %v303 = vpack.c.bf16 %v288, %v287
    %v304 = vpack.c.bf16 %v290, %v289
    %v305 = vpack.c.bf16 %v292, %v291
    %v306 = vpack.c.bf16 %v294, %v293
    %v307 = vpack.c.bf16 %v296, %v295
    %v308 = vpack.c.bf16 %v298, %v297
    %v309 = vpack.c.bf16 %v300, %v299
    %v310 = vpack.c.bf16 %v302, %v301
    %v319 = vunpack.c.l.b16 %v303
    %v320 = vunpack.c.h.b16 %v303
    %v321 = vunpack.c.l.b16 %v304
    %v322 = vunpack.c.h.b16 %v304
    %v323 = vunpack.c.l.b16 %v305
    %v324 = vunpack.c.h.b16 %v305
    %v325 = vunpack.c.l.b16 %v306
    %v326 = vunpack.c.h.b16 %v306
    %v327 = vunpack.c.l.b16 %v307
    %v328 = vunpack.c.h.b16 %v307
    %v329 = vunpack.c.l.b16 %v308
    %v330 = vunpack.c.h.b16 %v308
    %v331 = vunpack.c.l.b16 %v309
    %v332 = vunpack.c.h.b16 %v309
    %v333 = vunpack.c.l.b16 %v310
    %v334 = vunpack.c.h.b16 %v310
    %v335 = vpack.c.b16 %v319, %v319
    %v336 = vpack.c.b16 %v320, %v320
    %v337 = vpack.c.b16 %v321, %v321
    %v338 = vpack.c.b16 %v322, %v322
    %v339 = vpack.c.b16 %v323, %v323
    %v340 = vpack.c.b16 %v324, %v324
    %v341 = vpack.c.b16 %v325, %v325
    %v342 = vpack.c.b16 %v326, %v326
    %v343 = vpack.c.b16 %v327, %v327
    %v344 = vpack.c.b16 %v328, %v328
    %v345 = vpack.c.b16 %v329, %v329
    %v346 = vpack.c.b16 %v330, %v330
    %v347 = vpack.c.b16 %v331, %v331
    %v348 = vpack.c.b16 %v332, %v332
    %v349 = vpack.c.b16 %v333, %v333
    %v350 = vpack.c.b16 %v334, %v334
    %vm367 = vcmask 257024
    %368 = vst.msk [vmem:[#allocation3] sm:$0xf] %vm367, %v335
    %369 = vst.msk [vmem:[#allocation3 + $0x4] sm:$0xf] %vm367, %v336
    %370 = vst.msk [vmem:[#allocation3 + $0x8] sm:$0xf] %vm367, %v337
    %371 = vst.msk [vmem:[#allocation3 + $0xc] sm:$0xf] %vm367, %v338
    %372 = vst.msk [vmem:[#allocation3 + $0x10] sm:$0xf] %vm367, %v339
    %373 = vst.msk [vmem:[#allocation3 + $0x14] sm:$0xf] %vm367, %v340
    %374 = vst.msk [vmem:[#allocation3 + $0x18] sm:$0xf] %vm367, %v341
    %375 = vst.msk [vmem:[#allocation3 + $0x1c] sm:$0xf] %vm367, %v342
    %376 = vst.msk [vmem:[#allocation3 + $0x20] sm:$0xf] %vm367, %v343
    %377 = vst.msk [vmem:[#allocation3 + $0x24] sm:$0xf] %vm367, %v344
    %378 = vst.msk [vmem:[#allocation3 + $0x28] sm:$0xf] %vm367, %v345
    %379 = vst.msk [vmem:[#allocation3 + $0x2c] sm:$0xf] %vm367, %v346
    %380 = vst.msk [vmem:[#allocation3 + $0x30] sm:$0xf] %vm367, %v347
    %381 = vst.msk [vmem:[#allocation3 + $0x34] sm:$0xf] %vm367, %v348
    %382 = vst.msk [vmem:[#allocation3 + $0x38] sm:$0xf] %vm367, %v349
    %383 = vst.msk [vmem:[#allocation3 + $0x3c] sm:$0xf] %vm367, %v350
    %384 = vst.msk [vmem:[#allocation2] sm:$0xff] %vm47, 0.0
    %385 = vst.msk [vmem:[#allocation2 + $0x8] sm:$0xff] %vm47, 0.0
    %386 = vst.msk [vmem:[#allocation2 + $0x10] sm:$0xff] %vm47, 0.0
    %387 = vst.msk [vmem:[#allocation2 + $0x18] sm:$0xff] %vm47, 0.0
    %388 = vst.msk [vmem:[#allocation2 + $0x20] sm:$0xff] %vm47, 0.0
    %389 = vst.msk [vmem:[#allocation2 + $0x28] sm:$0xff] %vm47, 0.0
    %390 = vst.msk [vmem:[#allocation2 + $0x30] sm:$0xff] %vm47, 0.0
    %391 = vst.msk [vmem:[#allocation2 + $0x38] sm:$0xff] %vm47, 0.0
    %392 = vst.msk [vmem:[#allocation2 + $0x40] sm:$0xff] %vm47, 0.0
    %393 = vst.msk [vmem:[#allocation2 + $0x48] sm:$0xff] %vm47, 0.0
    %394 = vst.msk [vmem:[#allocation2 + $0x50] sm:$0xff] %vm47, 0.0
    %395 = vst.msk [vmem:[#allocation2 + $0x58] sm:$0xff] %vm47, 0.0
    %396 = vst.msk [vmem:[#allocation2 + $0x60] sm:$0xff] %vm47, 0.0
    %397 = vst.msk [vmem:[#allocation2 + $0x68] sm:$0xff] %vm47, 0.0
    %398 = vst.msk [vmem:[#allocation2 + $0x70] sm:$0xff] %vm47, 0.0
    %399 = vst.msk [vmem:[#allocation2 + $0x78] sm:$0xff] %vm47, 0.0
  $region33: #{tpu_custom_call.1} parent=0 // pred_fallthru
    _
  %v400 = vld [vmem:[#allocation3] sm:$0xf]
  %v401 = vld [vmem:[#allocation3 + $0x4] sm:$0xf]
  %v402 = vld [vmem:[#allocation3 + $0x8] sm:$0xf]
  %v403 = vld [vmem:[#allocation3 + $0xc] sm:$0xf]
  %v404 = vld [vmem:[#allocation3 + $0x10] sm:$0xf]
  %v405 = vld [vmem:[#allocation3 + $0x14] sm:$0xf]
  %v406 = vld [vmem:[#allocation3 + $0x18] sm:$0xf]
  %v407 = vld [vmem:[#allocation3 + $0x1c] sm:$0xf]
  %v408 = vld [vmem:[#allocation3 + $0x20] sm:$0xf]
  %v409 = vld [vmem:[#allocation3 + $0x24] sm:$0xf]
  %v410 = vld [vmem:[#allocation3 + $0x28] sm:$0xf]
  %v411 = vld [vmem:[#allocation3 + $0x2c] sm:$0xf]
  %v412 = vld [vmem:[#allocation3 + $0x30] sm:$0xf]
  %v413 = vld [vmem:[#allocation3 + $0x34] sm:$0xf]
  %v414 = vld [vmem:[#allocation3 + $0x38] sm:$0xf]
  %v415 = vld [vmem:[#allocation3 + $0x3c] sm:$0xf]
  %v416 = vld [vmem:[%s3] sm:$0xf]
  %v417 = vld [vmem:[%s3 + $0x4] sm:$0xf]
  %v418 = vld [vmem:[%s3 + $0x8] sm:$0xf]
  %v419 = vld [vmem:[%s3 + $0xc] sm:$0xf]
  %v420 = vld [vmem:[%s4] sm:$0x1]
  %v422 = vlaneseq
  %v423 = vshrl.u32 %v422, 7
  %v424 = vsub.s32 0, %v423
  %v425 = vrot.slane %v420, %v424
  %v443 = vunpack.c.l.b16 %v400
  %v444 = vunpack.c.l.b16 %v401
  %v445 = vunpack.c.l.b16 %v402
  %v446 = vunpack.c.l.b16 %v403
  %v447 = vunpack.c.l.b16 %v404
  %v448 = vunpack.c.l.b16 %v405
  %v449 = vunpack.c.l.b16 %v406
  %v450 = vunpack.c.l.b16 %v407
  %v451 = vunpack.c.l.b16 %v408
  %v452 = vunpack.c.l.b16 %v409
  %v453 = vunpack.c.l.b16 %v410
  %v454 = vunpack.c.l.b16 %v411
  %v455 = vunpack.c.l.b16 %v412
  %v456 = vunpack.c.l.b16 %v413
  %v457 = vunpack.c.l.b16 %v414
  %v458 = vunpack.c.l.b16 %v415
  %v459 = vpack.c.b16 %v444, %v443
  %v460 = vpack.c.b16 %v446, %v445
  %v461 = vpack.c.b16 %v448, %v447
  %v462 = vpack.c.b16 %v450, %v449
  %v463 = vpack.c.b16 %v452, %v451
  %v464 = vpack.c.b16 %v454, %v453
  %v465 = vpack.c.b16 %v456, %v455
  %v466 = vpack.c.b16 %v458, %v457
  %v471 = vunpack.c.l.b16 %v416
  %v472 = vunpack.c.l.b16 %v417
  %v473 = vunpack.c.l.b16 %v418
  %v474 = vunpack.c.l.b16 %v419
  %v475 = vpack.c.b16 %v472, %v471
  %v476 = vpack.c.b16 %v474, %v473
  %vm479 = vcmask 261120
  %v481 = vsel %vm479, %v459, 0
  %v484 = vsel %vm479, %v460, 0
  %v487 = vsel %vm479, %v461, 0
  %v490 = vsel %vm479, %v462, 0
  %v493 = vsel %vm479, %v463, 0
  %v496 = vsel %vm479, %v464, 0
  %v499 = vsel %vm479, %v465, 0
  %v502 = vsel %vm479, %v466, 0
  %504 = vmatprep.subr.bf16.mxu0 0
  %505 = vmatpush1.bf16.msra.mxu0 0
  %506 = vmatprep.subr.bf16.mxu0 0
  %507 = vmatpush1.bf16.msra.mxu0 0
  %508 = vmatprep.subr.bf16.mxu0 0
  %509 = vmatpush1.bf16.msra.mxu0 0
  %510 = vmatprep.subr.bf16.mxu0 0
  %511 = vmatpush1.bf16.msra.mxu0 0
  %512 = vmatprep.subr.bf16.mxu0 0
  %513 = vmatpush1.bf16.msra.mxu0 0
  %514 = vmatprep.subr.bf16.mxu0 0
  %515 = vmatpush1.bf16.msra.mxu0 0
  %516 = vmatprep.subr.bf16.mxu0 0
  %517 = vmatpush1.bf16.msra.mxu0 %v476
  %518 = vmatprep.subr.bf16.mxu0 0
  %519 = vmatpush1.bf16.msra.mxu0 %v475
  %520 = vmatprep.subr.bf16.mxu0 0
  %521 = vmatpush2.bf16.msra.mxu0 0
  %522 = vmatprep.subr.bf16.mxu0 0
  %523 = vmatpush2.bf16.msra.mxu0 0
  %524 = vmatprep.subr.bf16.mxu0 0
  %525 = vmatpush2.bf16.msra.mxu0 0
  %526 = vmatprep.subr.bf16.mxu0 0
  %527 = vmatpush2.bf16.msra.mxu0 0
  %528 = vmatprep.subr.bf16.mxu0 0
  %529 = vmatpush2.bf16.msra.mxu0 0
  %530 = vmatprep.subr.bf16.mxu0 0
  %531 = vmatpush2.bf16.msra.mxu0 0
  %532 = vmatprep.subr.bf16.mxu0 0
  %533 = vmatpush2.bf16.msra.mxu0 0
  %534 = vmatprep.subr.bf16.mxu0 0
  %535 = vmatpush2.bf16.msra.mxu0 0
  %536 = vmatprep.mubr.bf16.mxu0 0
  %537 = vmatmul.mubr.bf16.gmra.mxu0 %v481
  %v538 = vpop.f32.mrf.mxu0
  %v539 = vadd.f32 %v425, %v538
  %v540 = vpop.f32.mrf.mxu0
  %v541 = vpop.f32.mrf.mxu0
  %v542 = vadd.f32 %v425, %v541
  %v543 = vpop.f32.mrf.mxu0
  %544 = vmatprep.mubr.bf16.mxu0 0
  %545 = vmatmul.mubr.bf16.gmra.mxu0 %v484
  %v546 = vpop.f32.mrf.mxu0
  %v547 = vadd.f32 %v425, %v546
  %v548 = vpop.f32.mrf.mxu0
  %v549 = vpop.f32.mrf.mxu0
  %v550 = vadd.f32 %v425, %v549
  %v551 = vpop.f32.mrf.mxu0
  %552 = vmatprep.mubr.bf16.mxu0 0
  %553 = vmatmul.mubr.bf16.gmra.mxu0 %v487
  %v554 = vpop.f32.mrf.mxu0
  %v555 = vadd.f32 %v425, %v554
  %v556 = vpop.f32.mrf.mxu0
  %v557 = vpop.f32.mrf.mxu0
  %v558 = vadd.f32 %v425, %v557
  %v559 = vpop.f32.mrf.mxu0
  %560 = vmatprep.mubr.bf16.mxu0 0
  %561 = vmatmul.mubr.bf16.gmra.mxu0 %v490
  %v562 = vpop.f32.mrf.mxu0
  %v563 = vadd.f32 %v425, %v562
  %v564 = vpop.f32.mrf.mxu0
  %v565 = vpop.f32.mrf.mxu0
  %v566 = vadd.f32 %v425, %v565
  %v567 = vpop.f32.mrf.mxu0
  %568 = vmatprep.mubr.bf16.mxu0 0
  %569 = vmatmul.mubr.bf16.gmra.mxu0 %v493
  %v570 = vpop.f32.mrf.mxu0
  %v571 = vadd.f32 %v425, %v570
  %v572 = vpop.f32.mrf.mxu0
  %v573 = vpop.f32.mrf.mxu0
  %v574 = vadd.f32 %v425, %v573
  %v575 = vpop.f32.mrf.mxu0
  %576 = vmatprep.mubr.bf16.mxu0 0
  %577 = vmatmul.mubr.bf16.gmra.mxu0 %v496
  %v578 = vpop.f32.mrf.mxu0
  %v579 = vadd.f32 %v425, %v578
  %v580 = vpop.f32.mrf.mxu0
  %v581 = vpop.f32.mrf.mxu0
  %v582 = vadd.f32 %v425, %v581
  %v583 = vpop.f32.mrf.mxu0
  %584 = vmatprep.mubr.bf16.mxu0 0
  %585 = vmatmul.mubr.bf16.gmra.mxu0 %v499
  %v586 = vpop.f32.mrf.mxu0
  %v587 = vadd.f32 %v425, %v586
  %v588 = vpop.f32.mrf.mxu0
  %v589 = vpop.f32.mrf.mxu0
  %v590 = vadd.f32 %v425, %v589
  %v591 = vpop.f32.mrf.mxu0
  %592 = vmatprep.mubr.bf16.mxu0 0
  %593 = vmatmul.mubr.bf16.gmra.mxu0 %v502
  %v594 = vpop.f32.mrf.mxu0
  %v595 = vadd.f32 %v425, %v594
  %v596 = vpop.f32.mrf.mxu0
  %v597 = vpop.f32.mrf.mxu0
  %v598 = vadd.f32 %v425, %v597
  %v599 = vpop.f32.mrf.mxu0
  %600 = vdwg.mxu0
  %v601 = vmul.f32 %v539, %v539
  %v602 = vmul.f32 %v542, %v542
  %v603 = vmul.f32 %v547, %v547
  %v604 = vmul.f32 %v550, %v550
  %v605 = vmul.f32 %v555, %v555
  %v606 = vmul.f32 %v558, %v558
  %v607 = vmul.f32 %v563, %v563
  %v608 = vmul.f32 %v566, %v566
  %v609 = vmul.f32 %v571, %v571
  %v610 = vmul.f32 %v574, %v574
  %v611 = vmul.f32 %v579, %v579
  %v612 = vmul.f32 %v582, %v582
  %v613 = vmul.f32 %v587, %v587
  %v614 = vmul.f32 %v590, %v590
  %v615 = vmul.f32 %v595, %v595
  %v616 = vmul.f32 %v598, %v598
  %v617 = vmul.f32 %v539, %v601
  %v618 = vmul.f32 %v542, %v602
  %v619 = vmul.f32 %v547, %v603
  %v620 = vmul.f32 %v550, %v604
  %v621 = vmul.f32 %v555, %v605
  %v622 = vmul.f32 %v558, %v606
  %v623 = vmul.f32 %v563, %v607
  %v624 = vmul.f32 %v566, %v608
  %v625 = vmul.f32 %v571, %v609
  %v626 = vmul.f32 %v574, %v610
  %v627 = vmul.f32 %v579, %v611
  %v628 = vmul.f32 %v582, %v612
  %v629 = vmul.f32 %v587, %v613
  %v630 = vmul.f32 %v590, %v614
  %v631 = vmul.f32 %v595, %v615
  %v632 = vmul.f32 %v598, %v616
  %v633 = vmul.f32 %v617, 0.044715
  %v634 = vmul.f32 %v618, 0.044715
  %v635 = vmul.f32 %v619, 0.044715
  %v636 = vmul.f32 %v620, 0.044715
  %v637 = vmul.f32 %v621, 0.044715
  %v638 = vmul.f32 %v622, 0.044715
  %v639 = vmul.f32 %v623, 0.044715
  %v640 = vmul.f32 %v624, 0.044715
  %v641 = vmul.f32 %v625, 0.044715
  %v642 = vmul.f32 %v626, 0.044715
  %v643 = vmul.f32 %v627, 0.044715
  %v644 = vmul.f32 %v628, 0.044715
  %v645 = vmul.f32 %v629, 0.044715
  %v646 = vmul.f32 %v630, 0.044715
  %v647 = vmul.f32 %v631, 0.044715
  %v648 = vmul.f32 %v632, 0.044715
  %v649 = vadd.f32 %v539, %v633
  %v650 = vadd.f32 %v542, %v634
  %v651 = vadd.f32 %v547, %v635
  %v652 = vadd.f32 %v550, %v636
  %v653 = vadd.f32 %v555, %v637
  %v654 = vadd.f32 %v558, %v638
  %v655 = vadd.f32 %v563, %v639
  %v656 = vadd.f32 %v566, %v640
  %v657 = vadd.f32 %v571, %v641
  %v658 = vadd.f32 %v574, %v642
  %v659 = vadd.f32 %v579, %v643
  %v660 = vadd.f32 %v582, %v644
  %v661 = vadd.f32 %v587, %v645
  %v662 = vadd.f32 %v590, %v646
  %v663 = vadd.f32 %v595, %v647
  %v664 = vadd.f32 %v598, %v648
  %v665 = vmul.f32 %v649, 0.7978846
  %v666 = vmul.f32 %v650, 0.7978846
  %v667 = vmul.f32 %v651, 0.7978846
  %v668 = vmul.f32 %v652, 0.7978846
  %v669 = vmul.f32 %v653, 0.7978846
  %v670 = vmul.f32 %v654, 0.7978846
  %v671 = vmul.f32 %v655, 0.7978846
  %v672 = vmul.f32 %v656, 0.7978846
  %v673 = vmul.f32 %v657, 0.7978846
  %v674 = vmul.f32 %v658, 0.7978846
  %v675 = vmul.f32 %v659, 0.7978846
  %v676 = vmul.f32 %v660, 0.7978846
  %v677 = vmul.f32 %v661, 0.7978846
  %v678 = vmul.f32 %v662, 0.7978846
  %v679 = vmul.f32 %v663, 0.7978846
  %v680 = vmul.f32 %v664, 0.7978846
  %v681 = vtanh.pop %v665
  %v682 = vtanh.pop %v666
  %v683 = vtanh.pop %v667
  %v684 = vtanh.pop %v668
  %v685 = vtanh.pop %v669
  %v686 = vtanh.pop %v670
  %v687 = vtanh.pop %v671
  %v688 = vtanh.pop %v672
  %v689 = vtanh.pop %v673
  %v690 = vtanh.pop %v674
  %v691 = vtanh.pop %v675
  %v692 = vtanh.pop %v676
  %v693 = vtanh.pop %v677
  %v694 = vtanh.pop %v678
  %v695 = vtanh.pop %v679
  %v696 = vtanh.pop %v680
  %v697 = vadd.f32 %v681, 1.0
  %v698 = vadd.f32 %v682, 1.0
  %v699 = vadd.f32 %v683, 1.0
  %v700 = vadd.f32 %v684, 1.0
  %v701 = vadd.f32 %v685, 1.0
  %v702 = vadd.f32 %v686, 1.0
  %v703 = vadd.f32 %v687, 1.0
  %v704 = vadd.f32 %v688, 1.0
  %v705 = vadd.f32 %v689, 1.0
  %v706 = vadd.f32 %v690, 1.0
  %v707 = vadd.f32 %v691, 1.0
  %v708 = vadd.f32 %v692, 1.0
  %v709 = vadd.f32 %v693, 1.0
  %v710 = vadd.f32 %v694, 1.0
  %v711 = vadd.f32 %v695, 1.0
  %v712 = vadd.f32 %v696, 1.0
  %v713 = vmul.f32 %v697, 0.5
  %v714 = vmul.f32 %v698, 0.5
  %v715 = vmul.f32 %v699, 0.5
  %v716 = vmul.f32 %v700, 0.5
  %v717 = vmul.f32 %v701, 0.5
  %v718 = vmul.f32 %v702, 0.5
  %v719 = vmul.f32 %v703, 0.5
  %v720 = vmul.f32 %v704, 0.5
  %v721 = vmul.f32 %v705, 0.5
  %v722 = vmul.f32 %v706, 0.5
  %v723 = vmul.f32 %v707, 0.5
  %v724 = vmul.f32 %v708, 0.5
  %v725 = vmul.f32 %v709, 0.5
  %v726 = vmul.f32 %v710, 0.5
  %v727 = vmul.f32 %v711, 0.5
  %v728 = vmul.f32 %v712, 0.5
  %v729 = vmul.f32 %v539, %v713
  %v730 = vmul.f32 %v542, %v714
  %v731 = vmul.f32 %v547, %v715
  %v732 = vmul.f32 %v550, %v716
  %v733 = vmul.f32 %v555, %v717
  %v734 = vmul.f32 %v558, %v718
  %v735 = vmul.f32 %v563, %v719
  %v736 = vmul.f32 %v566, %v720
  %v737 = vmul.f32 %v571, %v721
  %v738 = vmul.f32 %v574, %v722
  %v739 = vmul.f32 %v579, %v723
  %v740 = vmul.f32 %v582, %v724
  %v741 = vmul.f32 %v587, %v725
  %v742 = vmul.f32 %v590, %v726
  %v743 = vmul.f32 %v595, %v727
  %v744 = vmul.f32 %v598, %v728
  %v745 = vld [vmem:[#allocation2] sm:$0xff]
  %v746 = vld [vmem:[#allocation2 + $0x8] sm:$0xff]
  %v747 = vld [vmem:[#allocation2 + $0x10] sm:$0xff]
  %v748 = vld [vmem:[#allocation2 + $0x18] sm:$0xff]
  %v749 = vld [vmem:[#allocation2 + $0x20] sm:$0xff]
  %v750 = vld [vmem:[#allocation2 + $0x28] sm:$0xff]
  %v751 = vld [vmem:[#allocation2 + $0x30] sm:$0xff]
  %v752 = vld [vmem:[#allocation2 + $0x38] sm:$0xff]
  %v753 = vld [vmem:[#allocation2 + $0x40] sm:$0xff]
  %v754 = vld [vmem:[#allocation2 + $0x48] sm:$0xff]
  %v755 = vld [vmem:[#allocation2 + $0x50] sm:$0xff]
  %v756 = vld [vmem:[#allocation2 + $0x58] sm:$0xff]
  %v757 = vld [vmem:[#allocation2 + $0x60] sm:$0xff]
  %v758 = vld [vmem:[#allocation2 + $0x68] sm:$0xff]
  %v759 = vld [vmem:[#allocation2 + $0x70] sm:$0xff]
  %v760 = vld [vmem:[#allocation2 + $0x78] sm:$0xff]
  %v761 = vpack.c.bf16 %v730, %v729
  %v762 = vpack.c.bf16 %v732, %v731
  %v763 = vpack.c.bf16 %v734, %v733
  %v764 = vpack.c.bf16 %v736, %v735
  %v765 = vpack.c.bf16 %v738, %v737
  %v766 = vpack.c.bf16 %v740, %v739
  %v767 = vpack.c.bf16 %v742, %v741
  %v768 = vpack.c.bf16 %v744, %v743
  %v769 = vld [vmem:[%s5] sm:$0xf]
  %v770 = vld [vmem:[%s5 + $0x4] sm:$0xf]
  %v771 = vld [vmem:[%s5 + $0x8] sm:$0xf]
  %v772 = vld [vmem:[%s5 + $0xc] sm:$0xf]
  %v773 = vld [vmem:[%s5 + $0x10] sm:$0xf]
  %v774 = vld [vmem:[%s5 + $0x14] sm:$0xf]
  %v775 = vld [vmem:[%s5 + $0x18] sm:$0xf]
  %v776 = vld [vmem:[%s5 + $0x1c] sm:$0xf]
  %v777 = vld [vmem:[%s5 + $0x20] sm:$0xf]
  %v778 = vld [vmem:[%s5 + $0x24] sm:$0xf]
  %v779 = vld [vmem:[%s5 + $0x28] sm:$0xf]
  %v780 = vld [vmem:[%s5 + $0x2c] sm:$0xf]
  %v781 = vld [vmem:[%s5 + $0x30] sm:$0xf]
  %v782 = vld [vmem:[%s5 + $0x34] sm:$0xf]
  %v783 = vld [vmem:[%s5 + $0x38] sm:$0xf]
  %v784 = vld [vmem:[%s5 + $0x3c] sm:$0xf]
  %v801 = vunpack.c.l.b16 %v769
  %v802 = vunpack.c.l.b16 %v770
  %v803 = vunpack.c.l.b16 %v771
  %v804 = vunpack.c.l.b16 %v772
  %v805 = vunpack.c.l.b16 %v773
  %v806 = vunpack.c.l.b16 %v774
  %v807 = vunpack.c.l.b16 %v775
  %v808 = vunpack.c.l.b16 %v776
  %v809 = vunpack.c.l.b16 %v777
  %v810 = vunpack.c.l.b16 %v778
  %v811 = vunpack.c.l.b16 %v779
  %v812 = vunpack.c.l.b16 %v780
  %v813 = vunpack.c.l.b16 %v781
  %v814 = vunpack.c.l.b16 %v782
  %v815 = vunpack.c.l.b16 %v783
  %v816 = vunpack.c.l.b16 %v784
  %v817 = vpack.c.b16 %v802, %v801
  %v818 = vpack.c.b16 %v804, %v803
  %v819 = vpack.c.b16 %v806, %v805
  %v820 = vpack.c.b16 %v808, %v807
  %v821 = vpack.c.b16 %v810, %v809
  %v822 = vpack.c.b16 %v812, %v811
  %v823 = vpack.c.b16 %v814, %v813
  %v824 = vpack.c.b16 %v816, %v815
  %833 = vmatprep.subr.bf16.mxu0 0
  %834 = vmatpush1.bf16.msra.mxu0 %v824
  %835 = vmatprep.subr.bf16.mxu0 0
  %836 = vmatpush1.bf16.msra.mxu0 %v823
  %837 = vmatprep.subr.bf16.mxu0 0
  %838 = vmatpush1.bf16.msra.mxu0 %v822
  %839 = vmatprep.subr.bf16.mxu0 0
  %840 = vmatpush1.bf16.msra.mxu0 %v821
  %841 = vmatprep.subr.bf16.mxu0 0
  %842 = vmatpush1.bf16.msra.mxu0 %v820
  %843 = vmatprep.subr.bf16.mxu0 0
  %844 = vmatpush1.bf16.msra.mxu0 %v819
  %845 = vmatprep.subr.bf16.mxu0 0
  %846 = vmatpush1.bf16.msra.mxu0 %v818
  %847 = vmatprep.subr.bf16.mxu0 0
  %848 = vmatpush1.bf16.msra.mxu0 %v817
  %849 = vmatprep.subr.bf16.mxu0 0
  %850 = vmatpush2.bf16.msra.mxu0 0
  %851 = vmatprep.subr.bf16.mxu0 0
  %852 = vmatpush2.bf16.msra.mxu0 0
  %853 = vmatprep.subr.bf16.mxu0 0
  %854 = vmatpush2.bf16.msra.mxu0 0
  %855 = vmatprep.subr.bf16.mxu0 0
  %856 = vmatpush2.bf16.msra.mxu0 0
  %857 = vmatprep.subr.bf16.mxu0 0
  %858 = vmatpush2.bf16.msra.mxu0 0
  %859 = vmatprep.subr.bf16.mxu0 0
  %860 = vmatpush2.bf16.msra.mxu0 0
  %861 = vmatprep.subr.bf16.mxu0 0
  %862 = vmatpush2.bf16.msra.mxu0 0
  %863 = vmatprep.subr.bf16.mxu0 0
  %864 = vmatpush2.bf16.msra.mxu0 0
  %865 = vmatprep.mubr.bf16.mxu0 0
  %866 = vmatmul.mubr.bf16.gmra.mxu0 %v761
  %v867 = vpop.f32.mrf.mxu0
  %v868 = vadd.f32 0.0, %v867
  %v869 = vpop.f32.mrf.mxu0
  %v870 = vpop.f32.mrf.mxu0
  %v871 = vadd.f32 0.0, %v870
  %v872 = vpop.f32.mrf.mxu0
  %873 = vmatprep.mubr.bf16.mxu0 0
  %874 = vmatmul.mubr.bf16.gmra.mxu0 %v762
  %v875 = vpop.f32.mrf.mxu0
  %v876 = vadd.f32 0.0, %v875
  %v877 = vpop.f32.mrf.mxu0
  %v878 = vpop.f32.mrf.mxu0
  %v879 = vadd.f32 0.0, %v878
  %v880 = vpop.f32.mrf.mxu0
  %881 = vmatprep.mubr.bf16.mxu0 0
  %882 = vmatmul.mubr.bf16.gmra.mxu0 %v763
  %v883 = vpop.f32.mrf.mxu0
  %v884 = vadd.f32 0.0, %v883
  %v885 = vpop.f32.mrf.mxu0
  %v886 = vpop.f32.mrf.mxu0
  %v887 = vadd.f32 0.0, %v886
  %v888 = vpop.f32.mrf.mxu0
  %889 = vmatprep.mubr.bf16.mxu0 0
  %890 = vmatmul.mubr.bf16.gmra.mxu0 %v764
  %v891 = vpop.f32.mrf.mxu0
  %v892 = vadd.f32 0.0, %v891
  %v893 = vpop.f32.mrf.mxu0
  %v894 = vpop.f32.mrf.mxu0
  %v895 = vadd.f32 0.0, %v894
  %v896 = vpop.f32.mrf.mxu0
  %897 = vmatprep.mubr.bf16.mxu0 0
  %898 = vmatmul.mubr.bf16.gmra.mxu0 %v765
  %v899 = vpop.f32.mrf.mxu0
  %v900 = vadd.f32 0.0, %v899
  %v901 = vpop.f32.mrf.mxu0
  %v902 = vpop.f32.mrf.mxu0
  %v903 = vadd.f32 0.0, %v902
  %v904 = vpop.f32.mrf.mxu0
  %905 = vmatprep.mubr.bf16.mxu0 0
  %906 = vmatmul.mubr.bf16.gmra.mxu0 %v766
  %v907 = vpop.f32.mrf.mxu0
  %v908 = vadd.f32 0.0, %v907
  %v909 = vpop.f32.mrf.mxu0
  %v910 = vpop.f32.mrf.mxu0
  %v911 = vadd.f32 0.0, %v910
  %v912 = vpop.f32.mrf.mxu0
  %913 = vmatprep.mubr.bf16.mxu0 0
  %914 = vmatmul.mubr.bf16.gmra.mxu0 %v767
  %v915 = vpop.f32.mrf.mxu0
  %v916 = vadd.f32 0.0, %v915
  %v917 = vpop.f32.mrf.mxu0
  %v918 = vpop.f32.mrf.mxu0
  %v919 = vadd.f32 0.0, %v918
  %v920 = vpop.f32.mrf.mxu0
  %921 = vmatprep.mubr.bf16.mxu0 0
  %922 = vmatmul.mubr.bf16.gmra.mxu0 %v768
  %v923 = vpop.f32.mrf.mxu0
  %v924 = vadd.f32 0.0, %v923
  %v925 = vpop.f32.mrf.mxu0
  %v926 = vpop.f32.mrf.mxu0
  %v927 = vadd.f32 0.0, %v926
  %v928 = vpop.f32.mrf.mxu0
  %929 = vdwg.mxu0
  %v930 = vadd.f32 %v745, %v868
  %v931 = vadd.f32 %v746, %v871
  %v932 = vadd.f32 %v747, %v876
  %v933 = vadd.f32 %v748, %v879
  %v934 = vadd.f32 %v749, %v884
  %v935 = vadd.f32 %v750, %v887
  %v936 = vadd.f32 %v751, %v892
  %v937 = vadd.f32 %v752, %v895
  %v938 = vadd.f32 %v753, %v900
  %v939 = vadd.f32 %v754, %v903
  %v940 = vadd.f32 %v755, %v908
  %v941 = vadd.f32 %v756, %v911
  %v942 = vadd.f32 %v757, %v916
  %v943 = vadd.f32 %v758, %v919
  %v944 = vadd.f32 %v759, %v924
  %v945 = vadd.f32 %v760, %v927
  %946 = vst.msk [vmem:[#allocation2] sm:$0xff] %vm479, %v930
  %947 = vst.msk [vmem:[#allocation2 + $0x8] sm:$0xff] %vm479, %v931
  %948 = vst.msk [vmem:[#allocation2 + $0x10] sm:$0xff] %vm479, %v932
  %949 = vst.msk [vmem:[#allocation2 + $0x18] sm:$0xff] %vm479, %v933
  %950 = vst.msk [vmem:[#allocation2 + $0x20] sm:$0xff] %vm479, %v934
  %951 = vst.msk [vmem:[#allocation2 + $0x28] sm:$0xff] %vm479, %v935
  %952 = vst.msk [vmem:[#allocation2 + $0x30] sm:$0xff] %vm479, %v936
  %953 = vst.msk [vmem:[#allocation2 + $0x38] sm:$0xff] %vm479, %v937
  %954 = vst.msk [vmem:[#allocation2 + $0x40] sm:$0xff] %vm479, %v938
  %955 = vst.msk [vmem:[#allocation2 + $0x48] sm:$0xff] %vm479, %v939
  %956 = vst.msk [vmem:[#allocation2 + $0x50] sm:$0xff] %vm479, %v940
  %957 = vst.msk [vmem:[#allocation2 + $0x58] sm:$0xff] %vm479, %v941
  %958 = vst.msk [vmem:[#allocation2 + $0x60] sm:$0xff] %vm479, %v942
  %959 = vst.msk [vmem:[#allocation2 + $0x68] sm:$0xff] %vm479, %v943
  %960 = vst.msk [vmem:[#allocation2 + $0x70] sm:$0xff] %vm479, %v944
  %961 = vst.msk [vmem:[#allocation2 + $0x78] sm:$0xff] %vm479, %v945
  // Predicated region
  $region34: #{tpu_custom_call.1} parent=0 // pred_check
    %p962 = pneg %p27
  $region35: #{tpu_custom_call.1} parent=0 // pred_check_branch
    %964 = sbr.rel (%p962) target = $region37
  $region36: #{tpu_custom_call.1} parent=0 // pred_region
    %v965 = vld [vmem:[#allocation2] sm:$0xff]
    %v966 = vld [vmem:[#allocation2 + $0x8] sm:$0xff]
    %v967 = vld [vmem:[#allocation2 + $0x10] sm:$0xff]
    %v968 = vld [vmem:[#allocation2 + $0x18] sm:$0xff]
    %v969 = vld [vmem:[#allocation2 + $0x20] sm:$0xff]
    %v970 = vld [vmem:[#allocation2 + $0x28] sm:$0xff]
    %v971 = vld [vmem:[#allocation2 + $0x30] sm:$0xff]
    %v972 = vld [vmem:[#allocation2 + $0x38] sm:$0xff]
    %v973 = vld [vmem:[#allocation2 + $0x40] sm:$0xff]
    %v974 = vld [vmem:[#allocation2 + $0x48] sm:$0xff]
    %v975 = vld [vmem:[#allocation2 + $0x50] sm:$0xff]
    %v976 = vld [vmem:[#allocation2 + $0x58] sm:$0xff]
    %v977 = vld [vmem:[#allocation2 + $0x60] sm:$0xff]
    %v978 = vld [vmem:[#allocation2 + $0x68] sm:$0xff]
    %v979 = vld [vmem:[#allocation2 + $0x70] sm:$0xff]
    %v980 = vld [vmem:[#allocation2 + $0x78] sm:$0xff]
    %v981 = vld [vmem:[%s6] sm:$0x1]
    %v983 = vlaneseq
    %v984 = vshrl.u32 %v983, 7
    %v985 = vsub.s32 0, %v984
    %v986 = vrot.slane %v981, %v985
    %v988 = vadd.f32 %v965, %v986
    %v989 = vadd.f32 %v966, %v986
    %v990 = vadd.f32 %v967, %v986
    %v991 = vadd.f32 %v968, %v986
    %v992 = vadd.f32 %v969, %v986
    %v993 = vadd.f32 %v970, %v986
    %v994 = vadd.f32 %v971, %v986
    %v995 = vadd.f32 %v972, %v986
    %v996 = vadd.f32 %v973, %v986
    %v997 = vadd.f32 %v974, %v986
    %v998 = vadd.f32 %v975, %v986
    %v999 = vadd.f32 %v976, %v986
    %v1000 = vadd.f32 %v977, %v986
    %v1001 = vadd.f32 %v978, %v986
    %v1002 = vadd.f32 %v979, %v986
    %v1003 = vadd.f32 %v980, %v986
    %v1004 = vld [vmem:[%s0] sm:$0xff]
    %v1005 = vld [vmem:[%s0 + $0x8] sm:$0xff]
    %v1006 = vld [vmem:[%s0 + $0x10] sm:$0xff]
    %v1007 = vld [vmem:[%s0 + $0x18] sm:$0xff]
    %v1008 = vld [vmem:[%s0 + $0x20] sm:$0xff]
    %v1009 = vld [vmem:[%s0 + $0x28] sm:$0xff]
    %v1010 = vld [vmem:[%s0 + $0x30] sm:$0xff]
    %v1011 = vld [vmem:[%s0 + $0x38] sm:$0xff]
    %v1012 = vld [vmem:[%s0 + $0x40] sm:$0xff]
    %v1013 = vld [vmem:[%s0 + $0x48] sm:$0xff]
    %v1014 = vld [vmem:[%s0 + $0x50] sm:$0xff]
    %v1015 = vld [vmem:[%s0 + $0x58] sm:$0xff]
    %v1016 = vld [vmem:[%s0 + $0x60] sm:$0xff]
    %v1017 = vld [vmem:[%s0 + $0x68] sm:$0xff]
    %v1018 = vld [vmem:[%s0 + $0x70] sm:$0xff]
    %v1019 = vld [vmem:[%s0 + $0x78] sm:$0xff]
    %v1020 = vadd.f32 %v988, %v1004
    %v1021 = vadd.f32 %v989, %v1005
    %v1022 = vadd.f32 %v990, %v1006
    %v1023 = vadd.f32 %v991, %v1007
    %v1024 = vadd.f32 %v992, %v1008
    %v1025 = vadd.f32 %v993, %v1009
    %v1026 = vadd.f32 %v994, %v1010
    %v1027 = vadd.f32 %v995, %v1011
    %v1028 = vadd.f32 %v996, %v1012
    %v1029 = vadd.f32 %v997, %v1013
    %v1030 = vadd.f32 %v998, %v1014
    %v1031 = vadd.f32 %v999, %v1015
    %v1032 = vadd.f32 %v1000, %v1016
    %v1033 = vadd.f32 %v1001, %v1017
    %v1034 = vadd.f32 %v1002, %v1018
    %v1035 = vadd.f32 %v1003, %v1019
    %1036 = vst.msk [vmem:[%s7] sm:$0xff] %vm479, %v1020
    %1037 = vst.msk [vmem:[%s7 + $0x8] sm:$0xff] %vm479, %v1021
    %1038 = vst.msk [vmem:[%s7 + $0x10] sm:$0xff] %vm479, %v1022
    %1039 = vst.msk [vmem:[%s7 + $0x18] sm:$0xff] %vm479, %v1023
    %1040 = vst.msk [vmem:[%s7 + $0x20] sm:$0xff] %vm479, %v1024
    %1041 = vst.msk [vmem:[%s7 + $0x28] sm:$0xff] %vm479, %v1025
    %1042 = vst.msk [vmem:[%s7 + $0x30] sm:$0xff] %vm479, %v1026
    %1043 = vst.msk [vmem:[%s7 + $0x38] sm:$0xff] %vm479, %v1027
    %1044 = vst.msk [vmem:[%s7 + $0x40] sm:$0xff] %vm479, %v1028
    %1045 = vst.msk [vmem:[%s7 + $0x48] sm:$0xff] %vm479, %v1029
    %1046 = vst.msk [vmem:[%s7 + $0x50] sm:$0xff] %vm479, %v1030
    %1047 = vst.msk [vmem:[%s7 + $0x58] sm:$0xff] %vm479, %v1031
    %1048 = vst.msk [vmem:[%s7 + $0x60] sm:$0xff] %vm479, %v1032
    %1049 = vst.msk [vmem:[%s7 + $0x68] sm:$0xff] %vm479, %v1033
    %1050 = vst.msk [vmem:[%s7 + $0x70] sm:$0xff] %vm479, %v1034
    %1051 = vst.msk [vmem:[%s7 + $0x78] sm:$0xff] %vm479, %v1035
  $region37: #{tpu_custom_call.1} parent=0 // pred_fallthru
    _
  // Predicated region
  $region38: #{tpu_custom_call.1} parent=0 // pred_check
    _
  $region39: #{tpu_custom_call.1} parent=0 // pred_check_branch
    %1053 = sbr.rel (0) target = $region41
  $region40: #{tpu_custom_call.1} parent=0 // pred_region
    _
  $region41: #{tpu_custom_call.1} parent=0 // pred_fallthru
    _
  // Predicated region
  $region42: #{tpu_custom_call.1} parent=0 // pred_check
    _
  $region43: #{tpu_custom_call.1} parent=0 // pred_check_branch
    %1055 = sbr.rel (0) target = $region45
  $region44: #{tpu_custom_call.1} parent=0 // pred_region
    _
  $region45: #{tpu_custom_call.1} parent=0 // pred_fallthru
    _

</llo_original>
